<compile_context>
chip_gen: v7x
topology: tpu7x:2x2x1
jax: 0.10.0
libtpu: 0.0.40
codegen_flags: <defaults>
</compile_context>

<pallas_src>
import functools

import jax
import jax.numpy as jnp
from jax.experimental import pallas as pl
from jax.experimental.pallas import tpu as pltpu


def _round_up(x, mult):
    return (x + mult - 1) // mult * mult


def _vmem_capacity_bytes():
    """Physical VMEM of the local TPU generation (fallback: 64 MiB)."""
    try:
        return int(pltpu.get_tpu_info().vmem_capacity_bytes)
    except Exception:
        return 64 << 20


def _ccl_kernel(x_ref, w_ref, o_ref):
    # x_ref: (TB, C*HW) f32   w_ref: (C*HW, n_pad) bf16   o_ref: (TB, n_pad) f32
    x_bf = x_ref[...].astype(jnp.bfloat16)          # in-VMEM cast -> native bf16 MXU path
    y = jnp.dot(x_bf, w_ref[...], preferred_element_type=jnp.float32)
    o_ref[...] = jnp.maximum(y, 0.0).astype(o_ref.dtype)


def _build_banded_weight(weight, *, C, HW, kd, n_out, n_pad, dtype=jnp.bfloat16):
    """Conv3d weight (1,1,kd,fs,fs) -> banded matmul weight (C*HW, n_pad)."""
    w2 = weight.reshape(kd, HW).astype(jnp.float32)           # (kd, HW)
    c = jnp.arange(C)[:, None]                                # (C, 1)
    co = jnp.arange(n_pad)[None, :]                           # (1, n_pad)
    dc = c - co                                               # (C, n_pad)
    valid = (dc >= 0) & (dc < kd) & (co < n_out)              # (C, n_pad)
    dc_safe = jnp.clip(dc, 0, kd - 1)
    band = jnp.where(valid[..., None], w2[dc_safe], 0.0)      # (C, n_pad, HW)
    return jnp.transpose(band, (0, 2, 1)).reshape(C * HW, n_pad).astype(dtype)


def ccl_prepare_weight(weight, *, m, n, feature_size):
    """One-time weight preprocessing (call once per weight, cache the result)."""
    kd = m - n + 1
    n_out = m - kd + 1                 # == n
    C = m
    HW = feature_size * feature_size
    n_pad = _round_up(n_out, 128)      # lane-dense output columns
    return _build_banded_weight(weight, C=C, HW=HW, kd=kd,
                                n_out=n_out, n_pad=n_pad)


@functools.partial(jax.jit, static_argnames=("m", "n", "feature_size", "tb_max"))
def ccl_forward(x, w_band, *, m, n, feature_size, tb_max=1024):
    """x: (N, m, fs, fs) f32; w_band: prepared (C*HW, n_pad) bf16 banded weight."""
    N, C, H, W = x.shape
    kd = m - n + 1
    n_out = C - kd + 1                 # == n
    HW = H * W
    CHW = C * HW
    n_pad = _round_up(n_out, 128)
    assert C == m and H == feature_size and W == feature_size
    assert w_band.shape == (CHW, n_pad)

    # Free reshape of contiguous NCHW; X stays f32 in HBM (no extra cast pass).
    x2 = x.reshape(N, CHW).astype(jnp.float32)

    # ---- VMEM-aware batch-tile sizing --------------------------------------
    vmem_cap = _vmem_capacity_bytes()
    # ~48 MiB on v7x (64 MiB physical), 64 MiB on v5e/v6e (128 MiB physical).
    vmem_limit_cap = int(min(vmem_cap * 3 // 4, 64 << 20))

    bytes_w = 2 * CHW * n_pad * 2            # bf16 weight, 2 buffers (DMA'd once)
    per_row = (2 * CHW + 2 * n_pad) * 4      # dbl-buffered f32 input + f32 output rows
    slack = 2 << 20                          # compiler-internal scratch headroom
    avail = vmem_limit_cap - bytes_w - slack
    if avail < 8 * per_row:
        # TODO(synk): band-windowed K tiling ("arbitrary" K axis + f32 VMEM
        # accumulator) is required once the banded weight outgrows VMEM.
        raise ValueError(
            f"CCL banded weight ({bytes_w} B) too large for VMEM "
            f"limit {vmem_limit_cap} B; needs K/band tiling.")

    tb_cap = max(8, (avail // per_row) // 8 * 8)
    # >= 2 grid blocks when possible so the 'parallel' axis feeds both v7x TCs.
    tb_split = _round_up(pl.cdiv(N, 2), 8)
    tb = max(8, min(tb_max, tb_cap, tb_split))
    grid = (pl.cdiv(N, tb),)                 # ragged last block handled by Pallas

    vmem_needed = bytes_w + tb * per_row + slack
    vmem_limit = int(min(max(vmem_needed, 16 << 20), vmem_limit_cap))

    # Useful FLOPs / actual traffic (memory-bound hint for XLA scheduling).
    cost = pl.CostEstimate(
        flops=2 * N * kd * HW * n_out,
        transcendentals=0,
        bytes_accessed=N * CHW * 4 + CHW * n_pad * 2 + N * n_pad * 4,
    )

    out = pl.pallas_call(
        _ccl_kernel,
        out_shape=jax.ShapeDtypeStruct((N, n_pad), jnp.float32),
        grid_spec=pltpu.PrefetchScalarGridSpec(
            num_scalar_prefetch=0,
            grid=grid,
            in_specs=[
                pl.BlockSpec((tb, CHW), lambda b: (b, 0)),
                # Constant index map -> fetched once, revisited without re-DMA.
                pl.BlockSpec((CHW, n_pad), lambda b: (0, 0)),
            ],
            out_specs=pl.BlockSpec((tb, n_pad), lambda b: (b, 0)),
        ),
        compiler_params=pltpu.CompilerParams(
            dimension_semantics=("parallel",),
            vmem_limit_bytes=vmem_limit),
        cost_estimate=cost,
    )(x2, w_band)

    # back to NCHW: (N, n, 1, 1)
    return out[:, :n_out].reshape(N, n_out, 1, 1)


def ccl_reference(x, weight, *, m, n, feature_size):
    kd = m - n + 1
    n_out = m - kd + 1
    w3 = weight.reshape(kd, feature_size, feature_size)
    cols = [jnp.einsum('bchw,chw->b', x[:, co:co + kd], w3)
            for co in range(n_out)]
    y = jnp.stack(cols, axis=1)
    return jnp.maximum(y, 0.0).reshape(x.shape[0], n_out, 1, 1)


if __name__ == "__main__":
    # Small shapes consistent with the module: m input channels -> n output
    # channels, spatial size == feature_size (so the Conv3d fully collapses
    # the spatial dims, as CCL intends).
    batch, m, n, feature_size = 2, 8, 4, 16
    kd = m - n + 1

    key = jax.random.PRNGKey(0)
    kx, kw = jax.random.split(key)
    x = jax.random.normal(kx, (batch, m, feature_size, feature_size),
                          dtype=jnp.float32)
    # Deterministic Conv3d weight: shape (out=1, in=1, kd, fs, fs), no bias.
    weight = 0.1 * jax.random.normal(
        kw, (1, 1, kd, feature_size, feature_size), dtype=jnp.float32)

    # Weight preprocessing is hoisted out of the per-forward path.
    w_band = ccl_prepare_weight(weight, m=m, n=n, feature_size=feature_size)

    y = ccl_forward(x, w_band, m=m, n=n, feature_size=feature_size)
    y = jax.block_until_ready(y)

    y_ref = ccl_reference(x, weight, m=m, n=n, feature_size=feature_size)
    assert y.shape == (batch, n, 1, 1)
    # bf16 operands with f32 accumulation -> relaxed tolerance vs f32 reference.
    assert jnp.allclose(y, y_ref, atol=5e-2, rtol=2e-2), (
        float(jnp.max(jnp.abs(y - y_ref))))

    print("KERNEL_OK")
</pallas_src>

<mosaic_0001>
module attributes {stable_mosaic.version = 11 : i64} {
  func.func @_ccl_kernel(%arg0: i32, %arg1: memref<8x2048xf32, #tpu.memory_space<vmem>>, %arg2: memref<2048x128xbf16, #tpu.memory_space<vmem>>, %arg3: memref<8x128xf32, #tpu.memory_space<vmem>>) attributes {dimension_semantics = [#tpu.dimension_semantics<parallel>], iteration_bounds = array<i64: 1>, scalar_prefetch = 0 : i64, scratch_operands = 0 : i64, tpu.core_type = #tpu.core_type<tc>, window_params = [{transform_indices = @transform_0, window_bounds = array<i64: 8, 2048>}, {pipeline_mode = #tpu.pipeline_mode<synchronous>, transform_indices = @transform_1, window_bounds = array<i64: 2048, 128>}, {transform_indices = @transform_2, window_bounds = array<i64: 8, 128>}]} {
    %c0 = arith.constant 0 : index
    %c0_0 = arith.constant 0 : index
    %0 = vector.load %arg1[%c0, %c0_0] : memref<8x2048xf32, #tpu.memory_space<vmem>>, vector<8x2048xf32>
    %1 = arith.truncf %0 : vector<8x2048xf32> to vector<8x2048xbf16>
    %c0_1 = arith.constant 0 : index
    %c0_2 = arith.constant 0 : index
    %2 = vector.load %arg2[%c0_1, %c0_2] : memref<2048x128xbf16, #tpu.memory_space<vmem>>, vector<2048x128xbf16>
    %cst = arith.constant dense<0.000000e+00> : vector<8x128xf32>
    %3 = tpu.matmul %1, %2, %cst {dimension_numbers = #tpu.dot_dimension_numbers<[1], [0], [0], [1], [0, 0, 1, 1], [], []>} : vector<8x2048xbf16>, vector<2048x128xbf16>, vector<8x128xf32> -> vector<8x128xf32>
    %cst_3 = arith.constant 0.000000e+00 : f32
    %4 = vector.broadcast %cst_3 : f32 to vector<8x128xf32>
    %5 = arith.maximumf %3, %4 : vector<8x128xf32>
    %c0_4 = arith.constant 0 : index
    %c0_5 = arith.constant 0 : index
    %6 = vector.load %arg3[%c0_4, %c0_5] : memref<8x128xf32, #tpu.memory_space<vmem>>, vector<8x128xf32>
    tpu.vector_store %arg3[%c0_4, %c0_5], %5 {strides = array<i32>} : memref<8x128xf32, #tpu.memory_space<vmem>>, vector<8x128xf32>,
    return
  }
  func.func @transform_0(%arg0: i32) -> (i32, i32) {
    %c0_i32 = arith.constant 0 : i32
    %c0_i32_0 = arith.constant 0 : i32
    return %arg0, %c0_i32 : i32, i32
  }
  func.func @transform_1(%arg0: i32) -> (i32, i32) {
    %c0_i32 = arith.constant 0 : i32
    %c0_i32_0 = arith.constant 0 : i32
    %c0_i32_1 = arith.constant 0 : i32
    return %c0_i32, %c0_i32_0 : i32, i32
  }
  func.func @transform_2(%arg0: i32) -> (i32, i32) {
    %c0_i32 = arith.constant 0 : i32
    %c0_i32_0 = arith.constant 0 : i32
    return %arg0, %c0_i32 : i32, i32
  }
}

</mosaic_0001>

<llo_original>
// kernel: ccl_forward.1
$region0: #{ccl_forward.1}
  #allocation0 [shape = 'u32[]', space=smem, size = 0x4, offset = 0x4, fixed_abs, tag = 'smem constant byte address 0x4 - core index']
  #allocation1 [shape = 'u32[144,128]{1,0:T(1,128)}', space=vmem, size = 0x12000, scoped, tag = 'internal scratch']
  %s0 = inlined_call_operand.vmem [shape: f32[2,2048], index: 0, kind: input, shape index: {}]
  %s1 = inlined_call_operand.hbm [shape: bf16[2048,128], index: 1, kind: input, shape index: {}]
  %s2 = inlined_call_operand.hbm [shape: f32[2,128], index: 2, kind: output, shape index: {}]
  %s3 = sld [smem:[#allocation0]]
  $region22: #{ccl_forward.1} parent=0
    _
  %s5 = ssub.s32 1, %s3
  %s6 = scalar_select 0, %s5, %s3
  $region1: #{ccl_forward.1} parent=0
    #allocation2 [shape = 'u8[524288]{0}', space=vmem, size = 0x80000, scoped, tag = 'input window, operand 1, single buffered']
    #allocation3 [shape = 's32[1]{0}', space=sflag, size = 0x4, scoped, tag = 'scoped memory for ccl_forward.1']
    #allocation4 [shape = 's32[1]{0}', space=sflag, size = 0x4, scoped, tag = 'scoped memory for ccl_forward.1']
    #allocation5 [shape = 'u8[4096]{0}', space=vmem, size = 0x1000, scoped, tag = 'output window, operand 0, single buffered']
    %7 = vsyncpa [#allocation3], 0
    %8 = vsyncpa [#allocation4], 0
    // Predicated region
    $region2: #{ccl_forward.1} parent=1 // pred_check
      _
    $region3: #{ccl_forward.1} parent=1 // pred_check_branch
      %10 = sbr.rel (0) target = $region5
    $region4: #{ccl_forward.1} parent=1 // pred_region
      _
    $region5: #{ccl_forward.1} parent=1 // pred_fallthru
      _
    // Predicated region
    $region6: #{ccl_forward.1} parent=1 // pred_check
      _
    $region7: #{ccl_forward.1} parent=1 // pred_check_branch
      %12 = sbr.rel (0) target = $region9
    $region8: #{ccl_forward.1} parent=1 // pred_region
      %s14 = ssub.s32 16384, 16384
      %15 = vsyncadd [#allocation3], %s14
      %s16 = sshll.u32 [#allocation2], 4
      %s17 = int_to_ptr.vmem [resolvable:$true] %s16
      %22 = dma.hbm_to_vmem [thread:$0]  %s1, 16384, %s17, [#allocation3], 64, 64, 4
    $region9: #{ccl_forward.1} parent=1 // pred_fallthru
      _
    // Predicated region
    $region10: #{ccl_forward.1} parent=1 // pred_check
      _
    $region11: #{ccl_forward.1} parent=1 // pred_check_branch
      %24 = sbr.rel (0) target = $region13
    $region12: #{ccl_forward.1} parent=1 // pred_region
      %25 = dma.done [#allocation3], 16384
    $region13: #{ccl_forward.1} parent=1 // pred_fallthru
      _
    %v27 = vld [vmem:[%s0] sm:$0xff]
    %v28 = vld [vmem:[%s0 + $0x8] sm:$0xff]
    %v29 = vld [vmem:[%s0 + $0x10] sm:$0xff]
    %v30 = vld [vmem:[%s0 + $0x18] sm:$0xff]
    %v31 = vld [vmem:[%s0 + $0x20] sm:$0xff]
    %v32 = vld [vmem:[%s0 + $0x28] sm:$0xff]
    %v33 = vld [vmem:[%s0 + $0x30] sm:$0xff]
    %v34 = vld [vmem:[%s0 + $0x38] sm:$0xff]
    %v35 = vld [vmem:[%s0 + $0x40] sm:$0xff]
    %v36 = vld [vmem:[%s0 + $0x48] sm:$0xff]
    %v37 = vld [vmem:[%s0 + $0x50] sm:$0xff]
    %v38 = vld [vmem:[%s0 + $0x58] sm:$0xff]
    %v39 = vld [vmem:[%s0 + $0x60] sm:$0xff]
    %v40 = vld [vmem:[%s0 + $0x68] sm:$0xff]
    %v41 = vld [vmem:[%s0 + $0x70] sm:$0xff]
    %v42 = vld [vmem:[%s0 + $0x78] sm:$0xff]
    %v59 = vcombine.low %v27, %v31
    %v60 = vcombine.high %v27, %v31
    %v61 = vcombine.low %v35, %v39
    %v62 = vcombine.high %v35, %v39
    %v64 = vunpack.c.l.s4 1983009808
    %v65 = vunpack.c.0.s8 %v64
    %v66 = vlaneseq
    %v67 = vshrl.u32 %v66, 7
    %v68 = vsub.s32 %v65, %v67
    %v69 = vrot.slane %v59, %v68
    %v71 = vunpack.c.l.s4 1983009808
    %v72 = vunpack.c.0.s8 %v71
    %v73 = vlaneseq
    %v74 = vshrl.u32 %v73, 7
    %v75 = vsub.s32 %v72, %v74
    %v76 = vrot.slane %v60, %v75
    %v78 = vunpack.c.l.s4 1983009808
    %v79 = vunpack.c.0.s8 %v78
    %v80 = vlaneseq
    %v81 = vshrl.u32 %v80, 7
    %v82 = vsub.s32 %v79, %v81
    %v83 = vrot.slane %v61, %v82
    %v85 = vunpack.c.l.s4 1983009808
    %v86 = vunpack.c.0.s8 %v85
    %v87 = vlaneseq
    %v88 = vshrl.u32 %v87, 7
    %v89 = vsub.s32 %v86, %v88
    %v90 = vrot.slane %v62, %v89
    %v91 = vcombine.low %v69, %v83
    %v92 = vcombine.high %v69, %v83
    %v93 = vcombine.low %v76, %v90
    %v94 = vcombine.high %v76, %v90
    %v95 = vcombine.low %v28, %v32
    %v96 = vcombine.high %v28, %v32
    %v97 = vcombine.low %v36, %v40
    %v98 = vcombine.high %v36, %v40
    %v100 = vunpack.c.l.s4 1983009808
    %v101 = vunpack.c.0.s8 %v100
    %v102 = vlaneseq
    %v103 = vshrl.u32 %v102, 7
    %v104 = vsub.s32 %v101, %v103
    %v105 = vrot.slane %v95, %v104
    %v107 = vunpack.c.l.s4 1983009808
    %v108 = vunpack.c.0.s8 %v107
    %v109 = vlaneseq
    %v110 = vshrl.u32 %v109, 7
    %v111 = vsub.s32 %v108, %v110
    %v112 = vrot.slane %v96, %v111
    %v114 = vunpack.c.l.s4 1983009808
    %v115 = vunpack.c.0.s8 %v114
    %v116 = vlaneseq
    %v117 = vshrl.u32 %v116, 7
    %v118 = vsub.s32 %v115, %v117
    %v119 = vrot.slane %v97, %v118
    %v121 = vunpack.c.l.s4 1983009808
    %v122 = vunpack.c.0.s8 %v121
    %v123 = vlaneseq
    %v124 = vshrl.u32 %v123, 7
    %v125 = vsub.s32 %v122, %v124
    %v126 = vrot.slane %v98, %v125
    %v127 = vcombine.low %v105, %v119
    %v128 = vcombine.high %v105, %v119
    %v129 = vcombine.low %v112, %v126
    %v130 = vcombine.high %v112, %v126
    %v131 = vcombine.low %v29, %v33
    %v132 = vcombine.high %v29, %v33
    %v133 = vcombine.low %v37, %v41
    %v134 = vcombine.high %v37, %v41
    %v136 = vunpack.c.l.s4 1983009808
    %v137 = vunpack.c.0.s8 %v136
    %v138 = vlaneseq
    %v139 = vshrl.u32 %v138, 7
    %v140 = vsub.s32 %v137, %v139
    %v141 = vrot.slane %v131, %v140
    %v143 = vunpack.c.l.s4 1983009808
    %v144 = vunpack.c.0.s8 %v143
    %v145 = vlaneseq
    %v146 = vshrl.u32 %v145, 7
    %v147 = vsub.s32 %v144, %v146
    %v148 = vrot.slane %v132, %v147
    %v150 = vunpack.c.l.s4 1983009808
    %v151 = vunpack.c.0.s8 %v150
    %v152 = vlaneseq
    %v153 = vshrl.u32 %v152, 7
    %v154 = vsub.s32 %v151, %v153
    %v155 = vrot.slane %v133, %v154
    %v157 = vunpack.c.l.s4 1983009808
    %v158 = vunpack.c.0.s8 %v157
    %v159 = vlaneseq
    %v160 = vshrl.u32 %v159, 7
    %v161 = vsub.s32 %v158, %v160
    %v162 = vrot.slane %v134, %v161
    %v163 = vcombine.low %v141, %v155
    %v164 = vcombine.high %v141, %v155
    %v165 = vcombine.low %v148, %v162
    %v166 = vcombine.high %v148, %v162
    %v167 = vcombine.low %v30, %v34
    %v168 = vcombine.high %v30, %v34
    %v169 = vcombine.low %v38, %v42
    %v170 = vcombine.high %v38, %v42
    %v172 = vunpack.c.l.s4 1983009808
    %v173 = vunpack.c.0.s8 %v172
    %v174 = vlaneseq
    %v175 = vshrl.u32 %v174, 7
    %v176 = vsub.s32 %v173, %v175
    %v177 = vrot.slane %v167, %v176
    %v179 = vunpack.c.l.s4 1983009808
    %v180 = vunpack.c.0.s8 %v179
    %v181 = vlaneseq
    %v182 = vshrl.u32 %v181, 7
    %v183 = vsub.s32 %v180, %v182
    %v184 = vrot.slane %v168, %v183
    %v186 = vunpack.c.l.s4 1983009808
    %v187 = vunpack.c.0.s8 %v186
    %v188 = vlaneseq
    %v189 = vshrl.u32 %v188, 7
    %v190 = vsub.s32 %v187, %v189
    %v191 = vrot.slane %v169, %v190
    %v193 = vunpack.c.l.s4 1983009808
    %v194 = vunpack.c.0.s8 %v193
    %v195 = vlaneseq
    %v196 = vshrl.u32 %v195, 7
    %v197 = vsub.s32 %v194, %v196
    %v198 = vrot.slane %v170, %v197
    %v199 = vcombine.low %v177, %v191
    %v200 = vcombine.high %v177, %v191
    %v201 = vcombine.low %v184, %v198
    %v202 = vcombine.high %v184, %v198
    %v219 = vpack.c.bf16 %v91, %v91
    %v220 = vpack.c.bf16 %v92, %v92
    %v221 = vpack.c.bf16 %v93, %v93
    %v222 = vpack.c.bf16 %v94, %v94
    %v223 = vpack.c.bf16 %v127, %v127
    %v224 = vpack.c.bf16 %v128, %v128
    %v225 = vpack.c.bf16 %v129, %v129
    %v226 = vpack.c.bf16 %v130, %v130
    %v227 = vpack.c.bf16 %v163, %v163
    %v228 = vpack.c.bf16 %v164, %v164
    %v229 = vpack.c.bf16 %v165, %v165
    %v230 = vpack.c.bf16 %v166, %v166
    %v231 = vpack.c.bf16 %v199, %v199
    %v232 = vpack.c.bf16 %v200, %v200
    %v233 = vpack.c.bf16 %v201, %v201
    %v234 = vpack.c.bf16 %v202, %v202
    %v235 = vld [vmem:[#allocation2] sm:$0xf]
    %v236 = vld [vmem:[#allocation2 + $0x4] sm:$0xf]
    %v237 = vld [vmem:[#allocation2 + $0x8] sm:$0xf]
    %v238 = vld [vmem:[#allocation2 + $0xc] sm:$0xf]
    %v239 = vld [vmem:[#allocation2 + $0x10] sm:$0xf]
    %v240 = vld [vmem:[#allocation2 + $0x14] sm:$0xf]
    %v241 = vld [vmem:[#allocation2 + $0x18] sm:$0xf]
    %v242 = vld [vmem:[#allocation2 + $0x1c] sm:$0xf]
    %v243 = vld [vmem:[#allocation2 + $0x20] sm:$0xf]
    %v244 = vld [vmem:[#allocation2 + $0x24] sm:$0xf]
    %v245 = vld [vmem:[#allocation2 + $0x28] sm:$0xf]
    %v246 = vld [vmem:[#allocation2 + $0x2c] sm:$0xf]
    %v247 = vld [vmem:[#allocation2 + $0x30] sm:$0xf]
    %v248 = vld [vmem:[#allocation2 + $0x34] sm:$0xf]
    %v249 = vld [vmem:[#allocation2 + $0x38] sm:$0xf]
    %v250 = vld [vmem:[#allocation2 + $0x3c] sm:$0xf]
    %v251 = vld [vmem:[#allocation2 + $0x40] sm:$0xf]
    %v252 = vld [vmem:[#allocation2 + $0x44] sm:$0xf]
    %v253 = vld [vmem:[#allocation2 + $0x48] sm:$0xf]
    %v254 = vld [vmem:[#allocation2 + $0x4c] sm:$0xf]
    %v255 = vld [vmem:[#allocation2 + $0x50] sm:$0xf]
    %v256 = vld [vmem:[#allocation2 + $0x54] sm:$0xf]
    %v257 = vld [vmem:[#allocation2 + $0x58] sm:$0xf]
    %v258 = vld [vmem:[#allocation2 + $0x5c] sm:$0xf]
    %v259 = vld [vmem:[#allocation2 + $0x60] sm:$0xf]
    %v260 = vld [vmem:[#allocation2 + $0x64] sm:$0xf]
    %v261 = vld [vmem:[#allocation2 + $0x68] sm:$0xf]
    %v262 = vld [vmem:[#allocation2 + $0x6c] sm:$0xf]
    %v263 = vld [vmem:[#allocation2 + $0x70] sm:$0xf]
    %v264 = vld [vmem:[#allocation2 + $0x74] sm:$0xf]
    %v265 = vld [vmem:[#allocation2 + $0x78] sm:$0xf]
    %v266 = vld [vmem:[#allocation2 + $0x7c] sm:$0xf]
    %v267 = vld [vmem:[#allocation2 + $0x80] sm:$0xf]
    %v268 = vld [vmem:[#allocation2 + $0x84] sm:$0xf]
    %v269 = vld [vmem:[#allocation2 + $0x88] sm:$0xf]
    %v270 = vld [vmem:[#allocation2 + $0x8c] sm:$0xf]
    %v271 = vld [vmem:[#allocation2 + $0x90] sm:$0xf]
    %v272 = vld [vmem:[#allocation2 + $0x94] sm:$0xf]
    %v273 = vld [vmem:[#allocation2 + $0x98] sm:$0xf]
    %v274 = vld [vmem:[#allocation2 + $0x9c] sm:$0xf]
    %v275 = vld [vmem:[#allocation2 + $0xa0] sm:$0xf]
    %v276 = vld [vmem:[#allocation2 + $0xa4] sm:$0xf]
    %v277 = vld [vmem:[#allocation2 + $0xa8] sm:$0xf]
    %v278 = vld [vmem:[#allocation2 + $0xac] sm:$0xf]
    %v279 = vld [vmem:[#allocation2 + $0xb0] sm:$0xf]
    %v280 = vld [vmem:[#allocation2 + $0xb4] sm:$0xf]
    %v281 = vld [vmem:[#allocation2 + $0xb8] sm:$0xf]
    %v282 = vld [vmem:[#allocation2 + $0xbc] sm:$0xf]
    %v283 = vld [vmem:[#allocation2 + $0xc0] sm:$0xf]
    %v284 = vld [vmem:[#allocation2 + $0xc4] sm:$0xf]
    %v285 = vld [vmem:[#allocation2 + $0xc8] sm:$0xf]
    %v286 = vld [vmem:[#allocation2 + $0xcc] sm:$0xf]
    %v287 = vld [vmem:[#allocation2 + $0xd0] sm:$0xf]
    %v288 = vld [vmem:[#allocation2 + $0xd4] sm:$0xf]
    %v289 = vld [vmem:[#allocation2 + $0xd8] sm:$0xf]
    %v290 = vld [vmem:[#allocation2 + $0xdc] sm:$0xf]
    %v291 = vld [vmem:[#allocation2 + $0xe0] sm:$0xf]
    %v292 = vld [vmem:[#allocation2 + $0xe4] sm:$0xf]
    %v293 = vld [vmem:[#allocation2 + $0xe8] sm:$0xf]
    %v294 = vld [vmem:[#allocation2 + $0xec] sm:$0xf]
    %v295 = vld [vmem:[#allocation2 + $0xf0] sm:$0xf]
    %v296 = vld [vmem:[#allocation2 + $0xf4] sm:$0xf]
    %v297 = vld [vmem:[#allocation2 + $0xf8] sm:$0xf]
    %v298 = vld [vmem:[#allocation2 + $0xfc] sm:$0xf]
    %v299 = vld [vmem:[#allocation2 + $0x100] sm:$0xf]
    %v300 = vld [vmem:[#allocation2 + $0x104] sm:$0xf]
    %v301 = vld [vmem:[#allocation2 + $0x108] sm:$0xf]
    %v302 = vld [vmem:[#allocation2 + $0x10c] sm:$0xf]
    %v303 = vld [vmem:[#allocation2 + $0x110] sm:$0xf]
    %v304 = vld [vmem:[#allocation2 + $0x114] sm:$0xf]
    %v305 = vld [vmem:[#allocation2 + $0x118] sm:$0xf]
    %v306 = vld [vmem:[#allocation2 + $0x11c] sm:$0xf]
    %v307 = vld [vmem:[#allocation2 + $0x120] sm:$0xf]
    %v308 = vld [vmem:[#allocation2 + $0x124] sm:$0xf]
    %v309 = vld [vmem:[#allocation2 + $0x128] sm:$0xf]
    %v310 = vld [vmem:[#allocation2 + $0x12c] sm:$0xf]
    %v311 = vld [vmem:[#allocation2 + $0x130] sm:$0xf]
    %v312 = vld [vmem:[#allocation2 + $0x134] sm:$0xf]
    %v313 = vld [vmem:[#allocation2 + $0x138] sm:$0xf]
    %v314 = vld [vmem:[#allocation2 + $0x13c] sm:$0xf]
    %v315 = vld [vmem:[#allocation2 + $0x140] sm:$0xf]
    %v316 = vld [vmem:[#allocation2 + $0x144] sm:$0xf]
    %v317 = vld [vmem:[#allocation2 + $0x148] sm:$0xf]
    %v318 = vld [vmem:[#allocation2 + $0x14c] sm:$0xf]
    %v319 = vld [vmem:[#allocation2 + $0x150] sm:$0xf]
    %v320 = vld [vmem:[#allocation2 + $0x154] sm:$0xf]
    %v321 = vld [vmem:[#allocation2 + $0x158] sm:$0xf]
    %v322 = vld [vmem:[#allocation2 + $0x15c] sm:$0xf]
    %v323 = vld [vmem:[#allocation2 + $0x160] sm:$0xf]
    %v324 = vld [vmem:[#allocation2 + $0x164] sm:$0xf]
    %v325 = vld [vmem:[#allocation2 + $0x168] sm:$0xf]
    %v326 = vld [vmem:[#allocation2 + $0x16c] sm:$0xf]
    %v327 = vld [vmem:[#allocation2 + $0x170] sm:$0xf]
    %v328 = vld [vmem:[#allocation2 + $0x174] sm:$0xf]
    %v329 = vld [vmem:[#allocation2 + $0x178] sm:$0xf]
    %v330 = vld [vmem:[#allocation2 + $0x17c] sm:$0xf]
    %v331 = vld [vmem:[#allocation2 + $0x180] sm:$0xf]
    %v332 = vld [vmem:[#allocation2 + $0x184] sm:$0xf]
    %v333 = vld [vmem:[#allocation2 + $0x188] sm:$0xf]
    %v334 = vld [vmem:[#allocation2 + $0x18c] sm:$0xf]
    %v335 = vld [vmem:[#allocation2 + $0x190] sm:$0xf]
    %v336 = vld [vmem:[#allocation2 + $0x194] sm:$0xf]
    %v337 = vld [vmem:[#allocation2 + $0x198] sm:$0xf]
    %v338 = vld [vmem:[#allocation2 + $0x19c] sm:$0xf]
    %v339 = vld [vmem:[#allocation2 + $0x1a0] sm:$0xf]
    %v340 = vld [vmem:[#allocation2 + $0x1a4] sm:$0xf]
    %v341 = vld [vmem:[#allocation2 + $0x1a8] sm:$0xf]
    %v342 = vld [vmem:[#allocation2 + $0x1ac] sm:$0xf]
    %v343 = vld [vmem:[#allocation2 + $0x1b0] sm:$0xf]
    %v344 = vld [vmem:[#allocation2 + $0x1b4] sm:$0xf]
    %v345 = vld [vmem:[#allocation2 + $0x1b8] sm:$0xf]
    %v346 = vld [vmem:[#allocation2 + $0x1bc] sm:$0xf]
    %v347 = vld [vmem:[#allocation2 + $0x1c0] sm:$0xf]
    %v348 = vld [vmem:[#allocation2 + $0x1c4] sm:$0xf]
    %v349 = vld [vmem:[#allocation2 + $0x1c8] sm:$0xf]
    %v350 = vld [vmem:[#allocation2 + $0x1cc] sm:$0xf]
    %v351 = vld [vmem:[#allocation2 + $0x1d0] sm:$0xf]
    %v352 = vld [vmem:[#allocation2 + $0x1d4] sm:$0xf]
    %v353 = vld [vmem:[#allocation2 + $0x1d8] sm:$0xf]
    %v354 = vld [vmem:[#allocation2 + $0x1dc] sm:$0xf]
    %v355 = vld [vmem:[#allocation2 + $0x1e0] sm:$0xf]
    %v356 = vld [vmem:[#allocation2 + $0x1e4] sm:$0xf]
    %v357 = vld [vmem:[#allocation2 + $0x1e8] sm:$0xf]
    %v358 = vld [vmem:[#allocation2 + $0x1ec] sm:$0xf]
    %v359 = vld [vmem:[#allocation2 + $0x1f0] sm:$0xf]
    %v360 = vld [vmem:[#allocation2 + $0x1f4] sm:$0xf]
    %v361 = vld [vmem:[#allocation2 + $0x1f8] sm:$0xf]
    %v362 = vld [vmem:[#allocation2 + $0x1fc] sm:$0xf]
    %v363 = vld [vmem:[#allocation2 + $0x200] sm:$0xf]
    %v364 = vld [vmem:[#allocation2 + $0x204] sm:$0xf]
    %v365 = vld [vmem:[#allocation2 + $0x208] sm:$0xf]
    %v366 = vld [vmem:[#allocation2 + $0x20c] sm:$0xf]
    %v367 = vld [vmem:[#allocation2 + $0x210] sm:$0xf]
    %v368 = vld [vmem:[#allocation2 + $0x214] sm:$0xf]
    %v369 = vld [vmem:[#allocation2 + $0x218] sm:$0xf]
    %v370 = vld [vmem:[#allocation2 + $0x21c] sm:$0xf]
    %v371 = vld [vmem:[#allocation2 + $0x220] sm:$0xf]
    %v372 = vld [vmem:[#allocation2 + $0x224] sm:$0xf]
    %v373 = vld [vmem:[#allocation2 + $0x228] sm:$0xf]
    %v374 = vld [vmem:[#allocation2 + $0x22c] sm:$0xf]
    %v375 = vld [vmem:[#allocation2 + $0x230] sm:$0xf]
    %v376 = vld [vmem:[#allocation2 + $0x234] sm:$0xf]
    %v377 = vld [vmem:[#allocation2 + $0x238] sm:$0xf]
    %v378 = vld [vmem:[#allocation2 + $0x23c] sm:$0xf]
    %v379 = vld [vmem:[#allocation2 + $0x240] sm:$0xf]
    %v380 = vld [vmem:[#allocation2 + $0x244] sm:$0xf]
    %v381 = vld [vmem:[#allocation2 + $0x248] sm:$0xf]
    %v382 = vld [vmem:[#allocation2 + $0x24c] sm:$0xf]
    %v383 = vld [vmem:[#allocation2 + $0x250] sm:$0xf]
    %v384 = vld [vmem:[#allocation2 + $0x254] sm:$0xf]
    %v385 = vld [vmem:[#allocation2 + $0x258] sm:$0xf]
    %v386 = vld [vmem:[#allocation2 + $0x25c] sm:$0xf]
    %v387 = vld [vmem:[#allocation2 + $0x260] sm:$0xf]
    %v388 = vld [vmem:[#allocation2 + $0x264] sm:$0xf]
    %v389 = vld [vmem:[#allocation2 + $0x268] sm:$0xf]
    %v390 = vld [vmem:[#allocation2 + $0x26c] sm:$0xf]
    %v391 = vld [vmem:[#allocation2 + $0x270] sm:$0xf]
    %v392 = vld [vmem:[#allocation2 + $0x274] sm:$0xf]
    %v393 = vld [vmem:[#allocation2 + $0x278] sm:$0xf]
    %v394 = vld [vmem:[#allocation2 + $0x27c] sm:$0xf]
    %v395 = vld [vmem:[#allocation2 + $0x280] sm:$0xf]
    %v396 = vld [vmem:[#allocation2 + $0x284] sm:$0xf]
    %v397 = vld [vmem:[#allocation2 + $0x288] sm:$0xf]
    %v398 = vld [vmem:[#allocation2 + $0x28c] sm:$0xf]
    %v399 = vld [vmem:[#allocation2 + $0x290] sm:$0xf]
    %v400 = vld [vmem:[#allocation2 + $0x294] sm:$0xf]
    %v401 = vld [vmem:[#allocation2 + $0x298] sm:$0xf]
    %v402 = vld [vmem:[#allocation2 + $0x29c] sm:$0xf]
    %v403 = vld [vmem:[#allocation2 + $0x2a0] sm:$0xf]
    %v404 = vld [vmem:[#allocation2 + $0x2a4] sm:$0xf]
    %v405 = vld [vmem:[#allocation2 + $0x2a8] sm:$0xf]
    %v406 = vld [vmem:[#allocation2 + $0x2ac] sm:$0xf]
    %v407 = vld [vmem:[#allocation2 + $0x2b0] sm:$0xf]
    %v408 = vld [vmem:[#allocation2 + $0x2b4] sm:$0xf]
    %v409 = vld [vmem:[#allocation2 + $0x2b8] sm:$0xf]
    %v410 = vld [vmem:[#allocation2 + $0x2bc] sm:$0xf]
    %v411 = vld [vmem:[#allocation2 + $0x2c0] sm:$0xf]
    %v412 = vld [vmem:[#allocation2 + $0x2c4] sm:$0xf]
    %v413 = vld [vmem:[#allocation2 + $0x2c8] sm:$0xf]
    %v414 = vld [vmem:[#allocation2 + $0x2cc] sm:$0xf]
    %v415 = vld [vmem:[#allocation2 + $0x2d0] sm:$0xf]
    %v416 = vld [vmem:[#allocation2 + $0x2d4] sm:$0xf]
    %v417 = vld [vmem:[#allocation2 + $0x2d8] sm:$0xf]
    %v418 = vld [vmem:[#allocation2 + $0x2dc] sm:$0xf]
    %v419 = vld [vmem:[#allocation2 + $0x2e0] sm:$0xf]
    %v420 = vld [vmem:[#allocation2 + $0x2e4] sm:$0xf]
    %v421 = vld [vmem:[#allocation2 + $0x2e8] sm:$0xf]
    %v422 = vld [vmem:[#allocation2 + $0x2ec] sm:$0xf]
    %v423 = vld [vmem:[#allocation2 + $0x2f0] sm:$0xf]
    %v424 = vld [vmem:[#allocation2 + $0x2f4] sm:$0xf]
    %v425 = vld [vmem:[#allocation2 + $0x2f8] sm:$0xf]
    %v426 = vld [vmem:[#allocation2 + $0x2fc] sm:$0xf]
    %v427 = vld [vmem:[#allocation2 + $0x300] sm:$0xf]
    %v428 = vld [vmem:[#allocation2 + $0x304] sm:$0xf]
    %v429 = vld [vmem:[#allocation2 + $0x308] sm:$0xf]
    %v430 = vld [vmem:[#allocation2 + $0x30c] sm:$0xf]
    %v431 = vld [vmem:[#allocation2 + $0x310] sm:$0xf]
    %v432 = vld [vmem:[#allocation2 + $0x314] sm:$0xf]
    %v433 = vld [vmem:[#allocation2 + $0x318] sm:$0xf]
    %v434 = vld [vmem:[#allocation2 + $0x31c] sm:$0xf]
    %v435 = vld [vmem:[#allocation2 + $0x320] sm:$0xf]
    %v436 = vld [vmem:[#allocation2 + $0x324] sm:$0xf]
    %v437 = vld [vmem:[#allocation2 + $0x328] sm:$0xf]
    %v438 = vld [vmem:[#allocation2 + $0x32c] sm:$0xf]
    %v439 = vld [vmem:[#allocation2 + $0x330] sm:$0xf]
    %v440 = vld [vmem:[#allocation2 + $0x334] sm:$0xf]
    %v441 = vld [vmem:[#allocation2 + $0x338] sm:$0xf]
    %v442 = vld [vmem:[#allocation2 + $0x33c] sm:$0xf]
    %v443 = vld [vmem:[#allocation2 + $0x340] sm:$0xf]
    %v444 = vld [vmem:[#allocation2 + $0x344] sm:$0xf]
    %v445 = vld [vmem:[#allocation2 + $0x348] sm:$0xf]
    %v446 = vld [vmem:[#allocation2 + $0x34c] sm:$0xf]
    %v447 = vld [vmem:[#allocation2 + $0x350] sm:$0xf]
    %v448 = vld [vmem:[#allocation2 + $0x354] sm:$0xf]
    %v449 = vld [vmem:[#allocation2 + $0x358] sm:$0xf]
    %v450 = vld [vmem:[#allocation2 + $0x35c] sm:$0xf]
    %v451 = vld [vmem:[#allocation2 + $0x360] sm:$0xf]
    %v452 = vld [vmem:[#allocation2 + $0x364] sm:$0xf]
    %v453 = vld [vmem:[#allocation2 + $0x368] sm:$0xf]
    %v454 = vld [vmem:[#allocation2 + $0x36c] sm:$0xf]
    %v455 = vld [vmem:[#allocation2 + $0x370] sm:$0xf]
    %v456 = vld [vmem:[#allocation2 + $0x374] sm:$0xf]
    %v457 = vld [vmem:[#allocation2 + $0x378] sm:$0xf]
    %v458 = vld [vmem:[#allocation2 + $0x37c] sm:$0xf]
    %v459 = vld [vmem:[#allocation2 + $0x380] sm:$0xf]
    %v460 = vld [vmem:[#allocation2 + $0x384] sm:$0xf]
    %v461 = vld [vmem:[#allocation2 + $0x388] sm:$0xf]
    %v462 = vld [vmem:[#allocation2 + $0x38c] sm:$0xf]
    %v463 = vld [vmem:[#allocation2 + $0x390] sm:$0xf]
    %v464 = vld [vmem:[#allocation2 + $0x394] sm:$0xf]
    %v465 = vld [vmem:[#allocation2 + $0x398] sm:$0xf]
    %v466 = vld [vmem:[#allocation2 + $0x39c] sm:$0xf]
    %v467 = vld [vmem:[#allocation2 + $0x3a0] sm:$0xf]
    %v468 = vld [vmem:[#allocation2 + $0x3a4] sm:$0xf]
    %v469 = vld [vmem:[#allocation2 + $0x3a8] sm:$0xf]
    %v470 = vld [vmem:[#allocation2 + $0x3ac] sm:$0xf]
    %v471 = vld [vmem:[#allocation2 + $0x3b0] sm:$0xf]
    %v472 = vld [vmem:[#allocation2 + $0x3b4] sm:$0xf]
    %v473 = vld [vmem:[#allocation2 + $0x3b8] sm:$0xf]
    %v474 = vld [vmem:[#allocation2 + $0x3bc] sm:$0xf]
    %v475 = vld [vmem:[#allocation2 + $0x3c0] sm:$0xf]
    %v476 = vld [vmem:[#allocation2 + $0x3c4] sm:$0xf]
    %v477 = vld [vmem:[#allocation2 + $0x3c8] sm:$0xf]
    %v478 = vld [vmem:[#allocation2 + $0x3cc] sm:$0xf]
    %v479 = vld [vmem:[#allocation2 + $0x3d0] sm:$0xf]
    %v480 = vld [vmem:[#allocation2 + $0x3d4] sm:$0xf]
    %v481 = vld [vmem:[#allocation2 + $0x3d8] sm:$0xf]
    %v482 = vld [vmem:[#allocation2 + $0x3dc] sm:$0xf]
    %v483 = vld [vmem:[#allocation2 + $0x3e0] sm:$0xf]
    %v484 = vld [vmem:[#allocation2 + $0x3e4] sm:$0xf]
    %v485 = vld [vmem:[#allocation2 + $0x3e8] sm:$0xf]
    %v486 = vld [vmem:[#allocation2 + $0x3ec] sm:$0xf]
    %v487 = vld [vmem:[#allocation2 + $0x3f0] sm:$0xf]
    %v488 = vld [vmem:[#allocation2 + $0x3f4] sm:$0xf]
    %v489 = vld [vmem:[#allocation2 + $0x3f8] sm:$0xf]
    %v490 = vld [vmem:[#allocation2 + $0x3fc] sm:$0xf]
    %v747 = vunpack.c.l.b16 %v235
    %v748 = vunpack.c.l.b16 %v236
    %v749 = vunpack.c.l.b16 %v237
    %v750 = vunpack.c.l.b16 %v238
    %v751 = vunpack.c.l.b16 %v239
    %v752 = vunpack.c.l.b16 %v240
    %v753 = vunpack.c.l.b16 %v241
    %v754 = vunpack.c.l.b16 %v242
    %v755 = vunpack.c.l.b16 %v243
    %v756 = vunpack.c.l.b16 %v244
    %v757 = vunpack.c.l.b16 %v245
    %v758 = vunpack.c.l.b16 %v246
    %v759 = vunpack.c.l.b16 %v247
    %v760 = vunpack.c.l.b16 %v248
    %v761 = vunpack.c.l.b16 %v249
    %v762 = vunpack.c.l.b16 %v250
    %v763 = vunpack.c.l.b16 %v251
    %v764 = vunpack.c.l.b16 %v252
    %v765 = vunpack.c.l.b16 %v253
    %v766 = vunpack.c.l.b16 %v254
    %v767 = vunpack.c.l.b16 %v255
    %v768 = vunpack.c.l.b16 %v256
    %v769 = vunpack.c.l.b16 %v257
    %v770 = vunpack.c.l.b16 %v258
    %v771 = vunpack.c.l.b16 %v259
    %v772 = vunpack.c.l.b16 %v260
    %v773 = vunpack.c.l.b16 %v261
    %v774 = vunpack.c.l.b16 %v262
    %v775 = vunpack.c.l.b16 %v263
    %v776 = vunpack.c.l.b16 %v264
    %v777 = vunpack.c.l.b16 %v265
    %v778 = vunpack.c.l.b16 %v266
    %v779 = vunpack.c.l.b16 %v267
    %v780 = vunpack.c.l.b16 %v268
    %v781 = vunpack.c.l.b16 %v269
    %v782 = vunpack.c.l.b16 %v270
    %v783 = vunpack.c.l.b16 %v271
    %v784 = vunpack.c.l.b16 %v272
    %v785 = vunpack.c.l.b16 %v273
    %v786 = vunpack.c.l.b16 %v274
    %v787 = vunpack.c.l.b16 %v275
    %v788 = vunpack.c.l.b16 %v276
    %v789 = vunpack.c.l.b16 %v277
    %v790 = vunpack.c.l.b16 %v278
    %v791 = vunpack.c.l.b16 %v279
    %v792 = vunpack.c.l.b16 %v280
    %v793 = vunpack.c.l.b16 %v281
    %v794 = vunpack.c.l.b16 %v282
    %v795 = vunpack.c.l.b16 %v283
    %v796 = vunpack.c.l.b16 %v284
    %v797 = vunpack.c.l.b16 %v285
    %v798 = vunpack.c.l.b16 %v286
    %v799 = vunpack.c.l.b16 %v287
    %v800 = vunpack.c.l.b16 %v288
    %v801 = vunpack.c.l.b16 %v289
    %v802 = vunpack.c.l.b16 %v290
    %v803 = vunpack.c.l.b16 %v291
    %v804 = vunpack.c.l.b16 %v292
    %v805 = vunpack.c.l.b16 %v293
    %v806 = vunpack.c.l.b16 %v294
    %v807 = vunpack.c.l.b16 %v295
    %v808 = vunpack.c.l.b16 %v296
    %v809 = vunpack.c.l.b16 %v297
    %v810 = vunpack.c.l.b16 %v298
    %v811 = vunpack.c.l.b16 %v299
    %v812 = vunpack.c.l.b16 %v300
    %v813 = vunpack.c.l.b16 %v301
    %v814 = vunpack.c.l.b16 %v302
    %v815 = vunpack.c.l.b16 %v303
    %v816 = vunpack.c.l.b16 %v304
    %v817 = vunpack.c.l.b16 %v305
    %v818 = vunpack.c.l.b16 %v306
    %v819 = vunpack.c.l.b16 %v307
    %v820 = vunpack.c.l.b16 %v308
    %v821 = vunpack.c.l.b16 %v309
    %v822 = vunpack.c.l.b16 %v310
    %v823 = vunpack.c.l.b16 %v311
    %v824 = vunpack.c.l.b16 %v312
    %v825 = vunpack.c.l.b16 %v313
    %v826 = vunpack.c.l.b16 %v314
    %v827 = vunpack.c.l.b16 %v315
    %v828 = vunpack.c.l.b16 %v316
    %v829 = vunpack.c.l.b16 %v317
    %v830 = vunpack.c.l.b16 %v318
    %v831 = vunpack.c.l.b16 %v319
    %v832 = vunpack.c.l.b16 %v320
    %v833 = vunpack.c.l.b16 %v321
    %v834 = vunpack.c.l.b16 %v322
    %v835 = vunpack.c.l.b16 %v323
    %v836 = vunpack.c.l.b16 %v324
    %v837 = vunpack.c.l.b16 %v325
    %v838 = vunpack.c.l.b16 %v326
    %v839 = vunpack.c.l.b16 %v327
    %v840 = vunpack.c.l.b16 %v328
    %v841 = vunpack.c.l.b16 %v329
    %v842 = vunpack.c.l.b16 %v330
    %v843 = vunpack.c.l.b16 %v331
    %v844 = vunpack.c.l.b16 %v332
    %v845 = vunpack.c.l.b16 %v333
    %v846 = vunpack.c.l.b16 %v334
    %v847 = vunpack.c.l.b16 %v335
    %v848 = vunpack.c.l.b16 %v336
    %v849 = vunpack.c.l.b16 %v337
    %v850 = vunpack.c.l.b16 %v338
    %v851 = vunpack.c.l.b16 %v339
    %v852 = vunpack.c.l.b16 %v340
    %v853 = vunpack.c.l.b16 %v341
    %v854 = vunpack.c.l.b16 %v342
    %v855 = vunpack.c.l.b16 %v343
    %v856 = vunpack.c.l.b16 %v344
    %v857 = vunpack.c.l.b16 %v345
    %v858 = vunpack.c.l.b16 %v346
    %v859 = vunpack.c.l.b16 %v347
    %v860 = vunpack.c.l.b16 %v348
    %v861 = vunpack.c.l.b16 %v349
    %v862 = vunpack.c.l.b16 %v350
    %v863 = vunpack.c.l.b16 %v351
    %v864 = vunpack.c.l.b16 %v352
    %v865 = vunpack.c.l.b16 %v353
    %v866 = vunpack.c.l.b16 %v354
    %v867 = vunpack.c.l.b16 %v355
    %v868 = vunpack.c.l.b16 %v356
    %v869 = vunpack.c.l.b16 %v357
    %v870 = vunpack.c.l.b16 %v358
    %v871 = vunpack.c.l.b16 %v359
    %v872 = vunpack.c.l.b16 %v360
    %v873 = vunpack.c.l.b16 %v361
    %v874 = vunpack.c.l.b16 %v362
    %v875 = vunpack.c.l.b16 %v363
    %v876 = vunpack.c.l.b16 %v364
    %v877 = vunpack.c.l.b16 %v365
    %v878 = vunpack.c.l.b16 %v366
    %v879 = vunpack.c.l.b16 %v367
    %v880 = vunpack.c.l.b16 %v368
    %v881 = vunpack.c.l.b16 %v369
    %v882 = vunpack.c.l.b16 %v370
    %v883 = vunpack.c.l.b16 %v371
    %v884 = vunpack.c.l.b16 %v372
    %v885 = vunpack.c.l.b16 %v373
    %v886 = vunpack.c.l.b16 %v374
    %v887 = vunpack.c.l.b16 %v375
    %v888 = vunpack.c.l.b16 %v376
    %v889 = vunpack.c.l.b16 %v377
    %v890 = vunpack.c.l.b16 %v378
    %v891 = vunpack.c.l.b16 %v379
    %v892 = vunpack.c.l.b16 %v380
    %v893 = vunpack.c.l.b16 %v381
    %v894 = vunpack.c.l.b16 %v382
    %v895 = vunpack.c.l.b16 %v383
    %v896 = vunpack.c.l.b16 %v384
    %v897 = vunpack.c.l.b16 %v385
    %v898 = vunpack.c.l.b16 %v386
    %v899 = vunpack.c.l.b16 %v387
    %v900 = vunpack.c.l.b16 %v388
    %v901 = vunpack.c.l.b16 %v389
    %v902 = vunpack.c.l.b16 %v390
    %v903 = vunpack.c.l.b16 %v391
    %v904 = vunpack.c.l.b16 %v392
    %v905 = vunpack.c.l.b16 %v393
    %v906 = vunpack.c.l.b16 %v394
    %v907 = vunpack.c.l.b16 %v395
    %v908 = vunpack.c.l.b16 %v396
    %v909 = vunpack.c.l.b16 %v397
    %v910 = vunpack.c.l.b16 %v398
    %v911 = vunpack.c.l.b16 %v399
    %v912 = vunpack.c.l.b16 %v400
    %v913 = vunpack.c.l.b16 %v401
    %v914 = vunpack.c.l.b16 %v402
    %v915 = vunpack.c.l.b16 %v403
    %v916 = vunpack.c.l.b16 %v404
    %v917 = vunpack.c.l.b16 %v405
    %v918 = vunpack.c.l.b16 %v406
    %v919 = vunpack.c.l.b16 %v407
    %v920 = vunpack.c.l.b16 %v408
    %v921 = vunpack.c.l.b16 %v409
    %v922 = vunpack.c.l.b16 %v410
    %v923 = vunpack.c.l.b16 %v411
    %v924 = vunpack.c.l.b16 %v412
    %v925 = vunpack.c.l.b16 %v413
    %v926 = vunpack.c.l.b16 %v414
    %v927 = vunpack.c.l.b16 %v415
    %v928 = vunpack.c.l.b16 %v416
    %v929 = vunpack.c.l.b16 %v417
    %v930 = vunpack.c.l.b16 %v418
    %v931 = vunpack.c.l.b16 %v419
    %v932 = vunpack.c.l.b16 %v420
    %v933 = vunpack.c.l.b16 %v421
    %v934 = vunpack.c.l.b16 %v422
    %v935 = vunpack.c.l.b16 %v423
    %v936 = vunpack.c.l.b16 %v424
    %v937 = vunpack.c.l.b16 %v425
    %v938 = vunpack.c.l.b16 %v426
    %v939 = vunpack.c.l.b16 %v427
    %v940 = vunpack.c.l.b16 %v428
    %v941 = vunpack.c.l.b16 %v429
    %v942 = vunpack.c.l.b16 %v430
    %v943 = vunpack.c.l.b16 %v431
    %v944 = vunpack.c.l.b16 %v432
    %v945 = vunpack.c.l.b16 %v433
    %v946 = vunpack.c.l.b16 %v434
    %v947 = vunpack.c.l.b16 %v435
    %v948 = vunpack.c.l.b16 %v436
    %v949 = vunpack.c.l.b16 %v437
    %v950 = vunpack.c.l.b16 %v438
    %v951 = vunpack.c.l.b16 %v439
    %v952 = vunpack.c.l.b16 %v440
    %v953 = vunpack.c.l.b16 %v441
    %v954 = vunpack.c.l.b16 %v442
    %v955 = vunpack.c.l.b16 %v443
    %v956 = vunpack.c.l.b16 %v444
    %v957 = vunpack.c.l.b16 %v445
    %v958 = vunpack.c.l.b16 %v446
    %v959 = vunpack.c.l.b16 %v447
    %v960 = vunpack.c.l.b16 %v448
    %v961 = vunpack.c.l.b16 %v449
    %v962 = vunpack.c.l.b16 %v450
    %v963 = vunpack.c.l.b16 %v451
    %v964 = vunpack.c.l.b16 %v452
    %v965 = vunpack.c.l.b16 %v453
    %v966 = vunpack.c.l.b16 %v454
    %v967 = vunpack.c.l.b16 %v455
    %v968 = vunpack.c.l.b16 %v456
    %v969 = vunpack.c.l.b16 %v457
    %v970 = vunpack.c.l.b16 %v458
    %v971 = vunpack.c.l.b16 %v459
    %v972 = vunpack.c.l.b16 %v460
    %v973 = vunpack.c.l.b16 %v461
    %v974 = vunpack.c.l.b16 %v462
    %v975 = vunpack.c.l.b16 %v463
    %v976 = vunpack.c.l.b16 %v464
    %v977 = vunpack.c.l.b16 %v465
    %v978 = vunpack.c.l.b16 %v466
    %v979 = vunpack.c.l.b16 %v467
    %v980 = vunpack.c.l.b16 %v468
    %v981 = vunpack.c.l.b16 %v469
    %v982 = vunpack.c.l.b16 %v470
    %v983 = vunpack.c.l.b16 %v471
    %v984 = vunpack.c.l.b16 %v472
    %v985 = vunpack.c.l.b16 %v473
    %v986 = vunpack.c.l.b16 %v474
    %v987 = vunpack.c.l.b16 %v475
    %v988 = vunpack.c.l.b16 %v476
    %v989 = vunpack.c.l.b16 %v477
    %v990 = vunpack.c.l.b16 %v478
    %v991 = vunpack.c.l.b16 %v479
    %v992 = vunpack.c.l.b16 %v480
    %v993 = vunpack.c.l.b16 %v481
    %v994 = vunpack.c.l.b16 %v482
    %v995 = vunpack.c.l.b16 %v483
    %v996 = vunpack.c.l.b16 %v484
    %v997 = vunpack.c.l.b16 %v485
    %v998 = vunpack.c.l.b16 %v486
    %v999 = vunpack.c.l.b16 %v487
    %v1000 = vunpack.c.l.b16 %v488
    %v1001 = vunpack.c.l.b16 %v489
    %v1002 = vunpack.c.l.b16 %v490
    %v1003 = vpack.c.b16 %v748, %v747
    %v1004 = vpack.c.b16 %v750, %v749
    %v1005 = vpack.c.b16 %v752, %v751
    %v1006 = vpack.c.b16 %v754, %v753
    %v1007 = vpack.c.b16 %v756, %v755
    %v1008 = vpack.c.b16 %v758, %v757
    %v1009 = vpack.c.b16 %v760, %v759
    %v1010 = vpack.c.b16 %v762, %v761
    %v1011 = vpack.c.b16 %v764, %v763
    %v1012 = vpack.c.b16 %v766, %v765
    %v1013 = vpack.c.b16 %v768, %v767
    %v1014 = vpack.c.b16 %v770, %v769
    %v1015 = vpack.c.b16 %v772, %v771
    %v1016 = vpack.c.b16 %v774, %v773
    %v1017 = vpack.c.b16 %v776, %v775
    %v1018 = vpack.c.b16 %v778, %v777
    %v1019 = vpack.c.b16 %v780, %v779
    %v1020 = vpack.c.b16 %v782, %v781
    %v1021 = vpack.c.b16 %v784, %v783
    %v1022 = vpack.c.b16 %v786, %v785
    %v1023 = vpack.c.b16 %v788, %v787
    %v1024 = vpack.c.b16 %v790, %v789
    %v1025 = vpack.c.b16 %v792, %v791
    %v1026 = vpack.c.b16 %v794, %v793
    %v1027 = vpack.c.b16 %v796, %v795
    %v1028 = vpack.c.b16 %v798, %v797
    %v1029 = vpack.c.b16 %v800, %v799
    %v1030 = vpack.c.b16 %v802, %v801
    %v1031 = vpack.c.b16 %v804, %v803
    %v1032 = vpack.c.b16 %v806, %v805
    %v1033 = vpack.c.b16 %v808, %v807
    %v1034 = vpack.c.b16 %v810, %v809
    %v1035 = vpack.c.b16 %v812, %v811
    %v1036 = vpack.c.b16 %v814, %v813
    %v1037 = vpack.c.b16 %v816, %v815
    %v1038 = vpack.c.b16 %v818, %v817
    %v1039 = vpack.c.b16 %v820, %v819
    %v1040 = vpack.c.b16 %v822, %v821
    %v1041 = vpack.c.b16 %v824, %v823
    %v1042 = vpack.c.b16 %v826, %v825
    %v1043 = vpack.c.b16 %v828, %v827
    %v1044 = vpack.c.b16 %v830, %v829
    %v1045 = vpack.c.b16 %v832, %v831
    %v1046 = vpack.c.b16 %v834, %v833
    %v1047 = vpack.c.b16 %v836, %v835
    %v1048 = vpack.c.b16 %v838, %v837
    %v1049 = vpack.c.b16 %v840, %v839
    %v1050 = vpack.c.b16 %v842, %v841
    %v1051 = vpack.c.b16 %v844, %v843
    %v1052 = vpack.c.b16 %v846, %v845
    %v1053 = vpack.c.b16 %v848, %v847
    %v1054 = vpack.c.b16 %v850, %v849
    %v1055 = vpack.c.b16 %v852, %v851
    %v1056 = vpack.c.b16 %v854, %v853
    %v1057 = vpack.c.b16 %v856, %v855
    %v1058 = vpack.c.b16 %v858, %v857
    %v1059 = vpack.c.b16 %v860, %v859
    %v1060 = vpack.c.b16 %v862, %v861
    %v1061 = vpack.c.b16 %v864, %v863
    %v1062 = vpack.c.b16 %v866, %v865
    %v1063 = vpack.c.b16 %v868, %v867
    %v1064 = vpack.c.b16 %v870, %v869
    %v1065 = vpack.c.b16 %v872, %v871
    %v1066 = vpack.c.b16 %v874, %v873
    %v1067 = vpack.c.b16 %v876, %v875
    %v1068 = vpack.c.b16 %v878, %v877
    %v1069 = vpack.c.b16 %v880, %v879
    %v1070 = vpack.c.b16 %v882, %v881
    %v1071 = vpack.c.b16 %v884, %v883
    %v1072 = vpack.c.b16 %v886, %v885
    %v1073 = vpack.c.b16 %v888, %v887
    %v1074 = vpack.c.b16 %v890, %v889
    %v1075 = vpack.c.b16 %v892, %v891
    %v1076 = vpack.c.b16 %v894, %v893
    %v1077 = vpack.c.b16 %v896, %v895
    %v1078 = vpack.c.b16 %v898, %v897
    %v1079 = vpack.c.b16 %v900, %v899
    %v1080 = vpack.c.b16 %v902, %v901
    %v1081 = vpack.c.b16 %v904, %v903
    %v1082 = vpack.c.b16 %v906, %v905
    %v1083 = vpack.c.b16 %v908, %v907
    %v1084 = vpack.c.b16 %v910, %v909
    %v1085 = vpack.c.b16 %v912, %v911
    %v1086 = vpack.c.b16 %v914, %v913
    %v1087 = vpack.c.b16 %v916, %v915
    %v1088 = vpack.c.b16 %v918, %v917
    %v1089 = vpack.c.b16 %v920, %v919
    %v1090 = vpack.c.b16 %v922, %v921
    %v1091 = vpack.c.b16 %v924, %v923
    %v1092 = vpack.c.b16 %v926, %v925
    %v1093 = vpack.c.b16 %v928, %v927
    %v1094 = vpack.c.b16 %v930, %v929
    %v1095 = vpack.c.b16 %v932, %v931
    %v1096 = vpack.c.b16 %v934, %v933
    %v1097 = vpack.c.b16 %v936, %v935
    %v1098 = vpack.c.b16 %v938, %v937
    %v1099 = vpack.c.b16 %v940, %v939
    %v1100 = vpack.c.b16 %v942, %v941
    %v1101 = vpack.c.b16 %v944, %v943
    %v1102 = vpack.c.b16 %v946, %v945
    %v1103 = vpack.c.b16 %v948, %v947
    %v1104 = vpack.c.b16 %v950, %v949
    %v1105 = vpack.c.b16 %v952, %v951
    %v1106 = vpack.c.b16 %v954, %v953
    %v1107 = vpack.c.b16 %v956, %v955
    %v1108 = vpack.c.b16 %v958, %v957
    %v1109 = vpack.c.b16 %v960, %v959
    %v1110 = vpack.c.b16 %v962, %v961
    %v1111 = vpack.c.b16 %v964, %v963
    %v1112 = vpack.c.b16 %v966, %v965
    %v1113 = vpack.c.b16 %v968, %v967
    %v1114 = vpack.c.b16 %v970, %v969
    %v1115 = vpack.c.b16 %v972, %v971
    %v1116 = vpack.c.b16 %v974, %v973
    %v1117 = vpack.c.b16 %v976, %v975
    %v1118 = vpack.c.b16 %v978, %v977
    %v1119 = vpack.c.b16 %v980, %v979
    %v1120 = vpack.c.b16 %v982, %v981
    %v1121 = vpack.c.b16 %v984, %v983
    %v1122 = vpack.c.b16 %v986, %v985
    %v1123 = vpack.c.b16 %v988, %v987
    %v1124 = vpack.c.b16 %v990, %v989
    %v1125 = vpack.c.b16 %v992, %v991
    %v1126 = vpack.c.b16 %v994, %v993
    %v1127 = vpack.c.b16 %v996, %v995
    %v1128 = vpack.c.b16 %v998, %v997
    %v1129 = vpack.c.b16 %v1000, %v999
    %v1130 = vpack.c.b16 %v1002, %v1001
    %1259 = vmatprep.subr.bf16.mxu0 0
    %1260 = vmatpush1.bf16.msra.mxu0 %v1003
    %1261 = vmatprep.subr.bf16.mxu0 0
    %1262 = vmatpush1.bf16.msra.mxu0 %v1004
    %1263 = vmatprep.subr.bf16.mxu0 0
    %1264 = vmatpush1.bf16.msra.mxu0 %v1005
    %1265 = vmatprep.subr.bf16.mxu0 0
    %1266 = vmatpush1.bf16.msra.mxu0 %v1006
    %1267 = vmatprep.subr.bf16.mxu0 0
    %1268 = vmatpush1.bf16.msra.mxu0 %v1007
    %1269 = vmatprep.subr.bf16.mxu0 0
    %1270 = vmatpush1.bf16.msra.mxu0 %v1008
    %1271 = vmatprep.subr.bf16.mxu0 0
    %1272 = vmatpush1.bf16.msra.mxu0 %v1009
    %1273 = vmatprep.subr.bf16.mxu0 0
    %1274 = vmatpush1.bf16.msra.mxu0 %v1010
    %1275 = vmatprep.subr.bf16.mxu0 0
    %1276 = vmatpush1.bf16.msra.mxu0 %v1011
    %1277 = vmatprep.subr.bf16.mxu0 0
    %1278 = vmatpush1.bf16.msra.mxu0 %v1012
    %1279 = vmatprep.subr.bf16.mxu0 0
    %1280 = vmatpush1.bf16.msra.mxu0 %v1013
    %1281 = vmatprep.subr.bf16.mxu0 0
    %1282 = vmatpush1.bf16.msra.mxu0 %v1014
    %1283 = vmatprep.subr.bf16.mxu0 0
    %1284 = vmatpush1.bf16.msra.mxu0 %v1015
    %1285 = vmatprep.subr.bf16.mxu0 0
    %1286 = vmatpush1.bf16.msra.mxu0 %v1016
    %1287 = vmatprep.subr.bf16.mxu0 0
    %1288 = vmatpush1.bf16.msra.mxu0 %v1017
    %1289 = vmatprep.subr.bf16.mxu0 0
    %1290 = vmatpush1.bf16.msra.mxu0 %v1018
    %1291 = vmatprep.mubr.bf16.mxu0 %v220
    %1292 = vmatmul.mubr.bf16.gmra.mrb[0].mxu0 %v219
    %v1293 = vpop.f32.mrb[0].mxu0
    %v1294 = vadd.f32 0.0, %v1293
    %v1295 = vpop.f32.mrb[0].mxu0
    %v1296 = vpop.f32.mrb[0].mxu0
    %v1297 = vpop.f32.mrb[0].mxu0
    %1298 = vdwg.mxu0
    %1299 = vmatprep.subr.bf16.mxu0 0
    %1300 = vmatpush1.bf16.msra.mxu0 %v1019
    %1301 = vmatprep.subr.bf16.mxu0 0
    %1302 = vmatpush1.bf16.msra.mxu0 %v1020
    %1303 = vmatprep.subr.bf16.mxu0 0
    %1304 = vmatpush1.bf16.msra.mxu0 %v1021
    %1305 = vmatprep.subr.bf16.mxu0 0
    %1306 = vmatpush1.bf16.msra.mxu0 %v1022
    %1307 = vmatprep.subr.bf16.mxu0 0
    %1308 = vmatpush1.bf16.msra.mxu0 %v1023
    %1309 = vmatprep.subr.bf16.mxu0 0
    %1310 = vmatpush1.bf16.msra.mxu0 %v1024
    %1311 = vmatprep.subr.bf16.mxu0 0
    %1312 = vmatpush1.bf16.msra.mxu0 %v1025
    %1313 = vmatprep.subr.bf16.mxu0 0
    %1314 = vmatpush1.bf16.msra.mxu0 %v1026
    %1315 = vmatprep.subr.bf16.mxu0 0
    %1316 = vmatpush1.bf16.msra.mxu0 %v1027
    %1317 = vmatprep.subr.bf16.mxu0 0
    %1318 = vmatpush1.bf16.msra.mxu0 %v1028
    %1319 = vmatprep.subr.bf16.mxu0 0
    %1320 = vmatpush1.bf16.msra.mxu0 %v1029
    %1321 = vmatprep.subr.bf16.mxu0 0
    %1322 = vmatpush1.bf16.msra.mxu0 %v1030
    %1323 = vmatprep.subr.bf16.mxu0 0
    %1324 = vmatpush1.bf16.msra.mxu0 %v1031
    %1325 = vmatprep.subr.bf16.mxu0 0
    %1326 = vmatpush1.bf16.msra.mxu0 %v1032
    %1327 = vmatprep.subr.bf16.mxu0 0
    %1328 = vmatpush1.bf16.msra.mxu0 %v1033
    %1329 = vmatprep.subr.bf16.mxu0 0
    %1330 = vmatpush1.bf16.msra.mxu0 %v1034
    %1331 = vmatprep.mubr.bf16.mxu0 %v222
    %1332 = vmatmul.mubr.bf16.gmra.mrb[0].mxu0 %v221
    %v1333 = vpop.f32.mrb[0].mxu0
    %v1334 = vadd.f32 %v1294, %v1333
    %v1335 = vpop.f32.mrb[0].mxu0
    %v1336 = vpop.f32.mrb[0].mxu0
    %v1337 = vpop.f32.mrb[0].mxu0
    %1338 = vdwg.mxu0
    %1339 = vmatprep.subr.bf16.mxu0 0
    %1340 = vmatpush1.bf16.msra.mxu0 %v1035
    %1341 = vmatprep.subr.bf16.mxu0 0
    %1342 = vmatpush1.bf16.msra.mxu0 %v1036
    %1343 = vmatprep.subr.bf16.mxu0 0
    %1344 = vmatpush1.bf16.msra.mxu0 %v1037
    %1345 = vmatprep.subr.bf16.mxu0 0
    %1346 = vmatpush1.bf16.msra.mxu0 %v1038
    %1347 = vmatprep.subr.bf16.mxu0 0
    %1348 = vmatpush1.bf16.msra.mxu0 %v1039
    %1349 = vmatprep.subr.bf16.mxu0 0
    %1350 = vmatpush1.bf16.msra.mxu0 %v1040
    %1351 = vmatprep.subr.bf16.mxu0 0
    %1352 = vmatpush1.bf16.msra.mxu0 %v1041
    %1353 = vmatprep.subr.bf16.mxu0 0
    %1354 = vmatpush1.bf16.msra.mxu0 %v1042
    %1355 = vmatprep.subr.bf16.mxu0 0
    %1356 = vmatpush1.bf16.msra.mxu0 %v1043
    %1357 = vmatprep.subr.bf16.mxu0 0
    %1358 = vmatpush1.bf16.msra.mxu0 %v1044
    %1359 = vmatprep.subr.bf16.mxu0 0
    %1360 = vmatpush1.bf16.msra.mxu0 %v1045
    %1361 = vmatprep.subr.bf16.mxu0 0
    %1362 = vmatpush1.bf16.msra.mxu0 %v1046
    %1363 = vmatprep.subr.bf16.mxu0 0
    %1364 = vmatpush1.bf16.msra.mxu0 %v1047
    %1365 = vmatprep.subr.bf16.mxu0 0
    %1366 = vmatpush1.bf16.msra.mxu0 %v1048
    %1367 = vmatprep.subr.bf16.mxu0 0
    %1368 = vmatpush1.bf16.msra.mxu0 %v1049
    %1369 = vmatprep.subr.bf16.mxu0 0
    %1370 = vmatpush1.bf16.msra.mxu0 %v1050
    %1371 = vmatprep.mubr.bf16.mxu0 %v224
    %1372 = vmatmul.mubr.bf16.gmra.mrb[0].mxu0 %v223
    %v1373 = vpop.f32.mrb[0].mxu0
    %v1374 = vadd.f32 %v1334, %v1373
    %v1375 = vpop.f32.mrb[0].mxu0
    %v1376 = vpop.f32.mrb[0].mxu0
    %v1377 = vpop.f32.mrb[0].mxu0
    %1378 = vdwg.mxu0
    %1379 = vmatprep.subr.bf16.mxu0 0
    %1380 = vmatpush1.bf16.msra.mxu0 %v1051
    %1381 = vmatprep.subr.bf16.mxu0 0
    %1382 = vmatpush1.bf16.msra.mxu0 %v1052
    %1383 = vmatprep.subr.bf16.mxu0 0
    %1384 = vmatpush1.bf16.msra.mxu0 %v1053
    %1385 = vmatprep.subr.bf16.mxu0 0
    %1386 = vmatpush1.bf16.msra.mxu0 %v1054
    %1387 = vmatprep.subr.bf16.mxu0 0
    %1388 = vmatpush1.bf16.msra.mxu0 %v1055
    %1389 = vmatprep.subr.bf16.mxu0 0
    %1390 = vmatpush1.bf16.msra.mxu0 %v1056
    %1391 = vmatprep.subr.bf16.mxu0 0
    %1392 = vmatpush1.bf16.msra.mxu0 %v1057
    %1393 = vmatprep.subr.bf16.mxu0 0
    %1394 = vmatpush1.bf16.msra.mxu0 %v1058
    %1395 = vmatprep.subr.bf16.mxu0 0
    %1396 = vmatpush1.bf16.msra.mxu0 %v1059
    %1397 = vmatprep.subr.bf16.mxu0 0
    %1398 = vmatpush1.bf16.msra.mxu0 %v1060
    %1399 = vmatprep.subr.bf16.mxu0 0
    %1400 = vmatpush1.bf16.msra.mxu0 %v1061
    %1401 = vmatprep.subr.bf16.mxu0 0
    %1402 = vmatpush1.bf16.msra.mxu0 %v1062
    %1403 = vmatprep.subr.bf16.mxu0 0
    %1404 = vmatpush1.bf16.msra.mxu0 %v1063
    %1405 = vmatprep.subr.bf16.mxu0 0
    %1406 = vmatpush1.bf16.msra.mxu0 %v1064
    %1407 = vmatprep.subr.bf16.mxu0 0
    %1408 = vmatpush1.bf16.msra.mxu0 %v1065
    %1409 = vmatprep.subr.bf16.mxu0 0
    %1410 = vmatpush1.bf16.msra.mxu0 %v1066
    %1411 = vmatprep.mubr.bf16.mxu0 %v226
    %1412 = vmatmul.mubr.bf16.gmra.mrb[0].mxu0 %v225
    %v1413 = vpop.f32.mrb[0].mxu0
    %v1414 = vadd.f32 %v1374, %v1413
    %v1415 = vpop.f32.mrb[0].mxu0
    %v1416 = vpop.f32.mrb[0].mxu0
    %v1417 = vpop.f32.mrb[0].mxu0
    %1418 = vdwg.mxu0
    %1419 = vmatprep.subr.bf16.mxu0 0
    %1420 = vmatpush1.bf16.msra.mxu0 %v1067
    %1421 = vmatprep.subr.bf16.mxu0 0
    %1422 = vmatpush1.bf16.msra.mxu0 %v1068
    %1423 = vmatprep.subr.bf16.mxu0 0
    %1424 = vmatpush1.bf16.msra.mxu0 %v1069
    %1425 = vmatprep.subr.bf16.mxu0 0
    %1426 = vmatpush1.bf16.msra.mxu0 %v1070
    %1427 = vmatprep.subr.bf16.mxu0 0
    %1428 = vmatpush1.bf16.msra.mxu0 %v1071
    %1429 = vmatprep.subr.bf16.mxu0 0
    %1430 = vmatpush1.bf16.msra.mxu0 %v1072
    %1431 = vmatprep.subr.bf16.mxu0 0
    %1432 = vmatpush1.bf16.msra.mxu0 %v1073
    %1433 = vmatprep.subr.bf16.mxu0 0
    %1434 = vmatpush1.bf16.msra.mxu0 %v1074
    %1435 = vmatprep.subr.bf16.mxu0 0
    %1436 = vmatpush1.bf16.msra.mxu0 %v1075
    %1437 = vmatprep.subr.bf16.mxu0 0
    %1438 = vmatpush1.bf16.msra.mxu0 %v1076
    %1439 = vmatprep.subr.bf16.mxu0 0
    %1440 = vmatpush1.bf16.msra.mxu0 %v1077
    %1441 = vmatprep.subr.bf16.mxu0 0
    %1442 = vmatpush1.bf16.msra.mxu0 %v1078
    %1443 = vmatprep.subr.bf16.mxu0 0
    %1444 = vmatpush1.bf16.msra.mxu0 %v1079
    %1445 = vmatprep.subr.bf16.mxu0 0
    %1446 = vmatpush1.bf16.msra.mxu0 %v1080
    %1447 = vmatprep.subr.bf16.mxu0 0
    %1448 = vmatpush1.bf16.msra.mxu0 %v1081
    %1449 = vmatprep.subr.bf16.mxu0 0
    %1450 = vmatpush1.bf16.msra.mxu0 %v1082
    %1451 = vmatprep.mubr.bf16.mxu0 %v228
    %1452 = vmatmul.mubr.bf16.gmra.mrb[0].mxu0 %v227
    %v1453 = vpop.f32.mrb[0].mxu0
    %v1454 = vadd.f32 %v1414, %v1453
    %v1455 = vpop.f32.mrb[0].mxu0
    %v1456 = vpop.f32.mrb[0].mxu0
    %v1457 = vpop.f32.mrb[0].mxu0
    %1458 = vdwg.mxu0
    %1459 = vmatprep.subr.bf16.mxu0 0
    %1460 = vmatpush1.bf16.msra.mxu0 %v1083
    %1461 = vmatprep.subr.bf16.mxu0 0
    %1462 = vmatpush1.bf16.msra.mxu0 %v1084
    %1463 = vmatprep.subr.bf16.mxu0 0
    %1464 = vmatpush1.bf16.msra.mxu0 %v1085
    %1465 = vmatprep.subr.bf16.mxu0 0
    %1466 = vmatpush1.bf16.msra.mxu0 %v1086
    %1467 = vmatprep.subr.bf16.mxu0 0
    %1468 = vmatpush1.bf16.msra.mxu0 %v1087
    %1469 = vmatprep.subr.bf16.mxu0 0
    %1470 = vmatpush1.bf16.msra.mxu0 %v1088
    %1471 = vmatprep.subr.bf16.mxu0 0
    %1472 = vmatpush1.bf16.msra.mxu0 %v1089
    %1473 = vmatprep.subr.bf16.mxu0 0
    %1474 = vmatpush1.bf16.msra.mxu0 %v1090
    %1475 = vmatprep.subr.bf16.mxu0 0
    %1476 = vmatpush1.bf16.msra.mxu0 %v1091
    %1477 = vmatprep.subr.bf16.mxu0 0
    %1478 = vmatpush1.bf16.msra.mxu0 %v1092
    %1479 = vmatprep.subr.bf16.mxu0 0
    %1480 = vmatpush1.bf16.msra.mxu0 %v1093
    %1481 = vmatprep.subr.bf16.mxu0 0
    %1482 = vmatpush1.bf16.msra.mxu0 %v1094
    %1483 = vmatprep.subr.bf16.mxu0 0
    %1484 = vmatpush1.bf16.msra.mxu0 %v1095
    %1485 = vmatprep.subr.bf16.mxu0 0
    %1486 = vmatpush1.bf16.msra.mxu0 %v1096
    %1487 = vmatprep.subr.bf16.mxu0 0
    %1488 = vmatpush1.bf16.msra.mxu0 %v1097
    %1489 = vmatprep.subr.bf16.mxu0 0
    %1490 = vmatpush1.bf16.msra.mxu0 %v1098
    %1491 = vmatprep.mubr.bf16.mxu0 %v230
    %1492 = vmatmul.mubr.bf16.gmra.mrb[0].mxu0 %v229
    %v1493 = vpop.f32.mrb[0].mxu0
    %v1494 = vadd.f32 %v1454, %v1493
    %v1495 = vpop.f32.mrb[0].mxu0
    %v1496 = vpop.f32.mrb[0].mxu0
    %v1497 = vpop.f32.mrb[0].mxu0
    %1498 = vdwg.mxu0
    %1499 = vmatprep.subr.bf16.mxu0 0
    %1500 = vmatpush1.bf16.msra.mxu0 %v1099
    %1501 = vmatprep.subr.bf16.mxu0 0
    %1502 = vmatpush1.bf16.msra.mxu0 %v1100
    %1503 = vmatprep.subr.bf16.mxu0 0
    %1504 = vmatpush1.bf16.msra.mxu0 %v1101
    %1505 = vmatprep.subr.bf16.mxu0 0
    %1506 = vmatpush1.bf16.msra.mxu0 %v1102
    %1507 = vmatprep.subr.bf16.mxu0 0
    %1508 = vmatpush1.bf16.msra.mxu0 %v1103
    %1509 = vmatprep.subr.bf16.mxu0 0
    %1510 = vmatpush1.bf16.msra.mxu0 %v1104
    %1511 = vmatprep.subr.bf16.mxu0 0
    %1512 = vmatpush1.bf16.msra.mxu0 %v1105
    %1513 = vmatprep.subr.bf16.mxu0 0
    %1514 = vmatpush1.bf16.msra.mxu0 %v1106
    %1515 = vmatprep.subr.bf16.mxu0 0
    %1516 = vmatpush1.bf16.msra.mxu0 %v1107
    %1517 = vmatprep.subr.bf16.mxu0 0
    %1518 = vmatpush1.bf16.msra.mxu0 %v1108
    %1519 = vmatprep.subr.bf16.mxu0 0
    %1520 = vmatpush1.bf16.msra.mxu0 %v1109
    %1521 = vmatprep.subr.bf16.mxu0 0
    %1522 = vmatpush1.bf16.msra.mxu0 %v1110
    %1523 = vmatprep.subr.bf16.mxu0 0
    %1524 = vmatpush1.bf16.msra.mxu0 %v1111
    %1525 = vmatprep.subr.bf16.mxu0 0
    %1526 = vmatpush1.bf16.msra.mxu0 %v1112
    %1527 = vmatprep.subr.bf16.mxu0 0
    %1528 = vmatpush1.bf16.msra.mxu0 %v1113
    %1529 = vmatprep.subr.bf16.mxu0 0
    %1530 = vmatpush1.bf16.msra.mxu0 %v1114
    %1531 = vmatprep.mubr.bf16.mxu0 %v232
    %1532 = vmatmul.mubr.bf16.gmra.mrb[0].mxu0 %v231
    %v1533 = vpop.f32.mrb[0].mxu0
    %v1534 = vadd.f32 %v1494, %v1533
    %v1535 = vpop.f32.mrb[0].mxu0
    %v1536 = vpop.f32.mrb[0].mxu0
    %v1537 = vpop.f32.mrb[0].mxu0
    %1538 = vdwg.mxu0
    %1539 = vmatprep.subr.bf16.mxu0 0
    %1540 = vmatpush1.bf16.msra.mxu0 %v1115
    %1541 = vmatprep.subr.bf16.mxu0 0
    %1542 = vmatpush1.bf16.msra.mxu0 %v1116
    %1543 = vmatprep.subr.bf16.mxu0 0
    %1544 = vmatpush1.bf16.msra.mxu0 %v1117
    %1545 = vmatprep.subr.bf16.mxu0 0
    %1546 = vmatpush1.bf16.msra.mxu0 %v1118
    %1547 = vmatprep.subr.bf16.mxu0 0
    %1548 = vmatpush1.bf16.msra.mxu0 %v1119
    %1549 = vmatprep.subr.bf16.mxu0 0
    %1550 = vmatpush1.bf16.msra.mxu0 %v1120
    %1551 = vmatprep.subr.bf16.mxu0 0
    %1552 = vmatpush1.bf16.msra.mxu0 %v1121
    %1553 = vmatprep.subr.bf16.mxu0 0
    %1554 = vmatpush1.bf16.msra.mxu0 %v1122
    %1555 = vmatprep.subr.bf16.mxu0 0
    %1556 = vmatpush1.bf16.msra.mxu0 %v1123
    %1557 = vmatprep.subr.bf16.mxu0 0
    %1558 = vmatpush1.bf16.msra.mxu0 %v1124
    %1559 = vmatprep.subr.bf16.mxu0 0
    %1560 = vmatpush1.bf16.msra.mxu0 %v1125
    %1561 = vmatprep.subr.bf16.mxu0 0
    %1562 = vmatpush1.bf16.msra.mxu0 %v1126
    %1563 = vmatprep.subr.bf16.mxu0 0
    %1564 = vmatpush1.bf16.msra.mxu0 %v1127
    %1565 = vmatprep.subr.bf16.mxu0 0
    %1566 = vmatpush1.bf16.msra.mxu0 %v1128
    %1567 = vmatprep.subr.bf16.mxu0 0
    %1568 = vmatpush1.bf16.msra.mxu0 %v1129
    %1569 = vmatprep.subr.bf16.mxu0 0
    %1570 = vmatpush1.bf16.msra.mxu0 %v1130
    %1571 = vmatprep.mubr.bf16.mxu0 %v234
    %1572 = vmatmul.mubr.bf16.gmra.mrb[0].mxu0 %v233
    %v1573 = vpop.f32.mrb[0].mxu0
    %v1574 = vadd.f32 %v1534, %v1573
    %v1575 = vpop.f32.mrb[0].mxu0
    %v1576 = vpop.f32.mrb[0].mxu0
    %v1577 = vpop.f32.mrb[0].mxu0
    %1578 = vdwg.mxu0
    %v1579 = vmax.f32 %v1574, 0.0
    %1580 = vst [vmem:[#allocation5] sm:$0xff] %v1579
    // Predicated region
    $region14: #{ccl_forward.1} parent=1 // pred_check
      _
    $region15: #{ccl_forward.1} parent=1 // pred_check_branch
      %1582 = sbr.rel (0) target = $region17
    $region16: #{ccl_forward.1} parent=1 // pred_region
      %s1584 = ssub.s32 128, 32
      %1585 = vsyncadd [#allocation4], %s1584
      %s1586 = sshll.u32 [#allocation5], 4
      %s1587 = int_to_ptr.vmem [resolvable:$true] %s1586
      %1592 = dma.vmem_to_hbm [thread:$0]  %s1587, 32, %s2, [#allocation4], 32, 32, 2
    $region17: #{ccl_forward.1} parent=1 // pred_fallthru
      _
    // Predicated region
    $region18: #{ccl_forward.1} parent=1 // pred_check
      _
    $region19: #{ccl_forward.1} parent=1 // pred_check_branch
      %1594 = sbr.rel (0) target = $region21
    $region20: #{ccl_forward.1} parent=1 // pred_region
      %1595 = dma.done [#allocation4], 128
    $region21: #{ccl_forward.1} parent=1 // pred_fallthru
      _
    %1596 = vsyncpa [#allocation3], 1
    %1597 = vsyncpa [#allocation4], 1

</llo_original>
